<compile_context>
chip_gen: v6e
topology: v6e:2x2x1
jax: 0.10.0
libtpu: 0.0.40
codegen_flags: <defaults>
</compile_context>

<pallas_src>
import functools
import math

import jax
import jax.numpy as jnp
from jax import lax
from jax.experimental import pallas as pl
from jax.experimental.pallas import tpu as pltpu


def _flash_attn_kernel(xq_ref, xkv_ref, w_ref, b_ref, o_ref,
                       q_scr, m_scr, l_scr, acc_scr,
                       *, scale, mxu_dtype):
    """One (batch, q-tile, kv-tile) step of fused QKV projection + flash attention."""
    ki = pl.program_id(2)

    # ---- init per (batch, query tile): project Q once, reset running stats ----
    @pl.when(ki == 0)
    def _init():
        xq = xq_ref[0].astype(mxu_dtype)                                # (TQ, E)
        q = jnp.dot(xq, w_ref[0],
                    preferred_element_type=jnp.float32) + b_ref[0]      # (TQ, E) f32
        q_scr[...] = (q * scale).astype(q_scr.dtype)                    # fold 1/sqrt(E)
        m_scr[...] = jnp.full_like(m_scr, -jnp.inf)
        l_scr[...] = jnp.zeros_like(l_scr)
        acc_scr[...] = jnp.zeros_like(acc_scr)

    # ---- K/V projection for this kv tile (leading-axis weight slices: no lane shuffles) ----
    xkv = xkv_ref[0].astype(mxu_dtype)                                  # (TK, E)
    k = (jnp.dot(xkv, w_ref[1], preferred_element_type=jnp.float32)
         + b_ref[1]).astype(mxu_dtype)                                  # (TK, E)
    v = (jnp.dot(xkv, w_ref[2], preferred_element_type=jnp.float32)
         + b_ref[2]).astype(mxu_dtype)                                  # (TK, E)

    # ---- scores: contract last dims directly (no explicit k transpose) ----
    s = lax.dot_general(q_scr[...], k,
                        dimension_numbers=(((1,), (1,)), ((), ())),
                        preferred_element_type=jnp.float32)             # (TQ, TK) f32

    # ---- online softmax update (all f32 on VPU / EUP) ----
    m_prev = m_scr[...]
    m_new = jnp.maximum(m_prev, jnp.max(s, axis=-1, keepdims=True))
    alpha = jnp.exp(m_prev - m_new)
    p = jnp.exp(s - m_new)                                              # (TQ, TK)
    l_scr[...] = alpha * l_scr[...] + jnp.sum(p, axis=-1, keepdims=True)
    acc_scr[...] = alpha * acc_scr[...] + jnp.dot(
        p.astype(mxu_dtype), v, preferred_element_type=jnp.float32)
    m_scr[...] = m_new

    # ---- finalize on the last kv tile ----
    @pl.when(ki == pl.num_programs(2) - 1)
    def _finalize():
        inv_l = pl.reciprocal(l_scr[...], approx=True)                  # EUP vrcp (free slot)
        o_ref[0] = (acc_scr[...] * inv_l).astype(o_ref.dtype)


def self_attention_pallas(x, wq, bq, wk, bk, wv, bv, *,
                          tq=None, tk=None, mxu_dtype=jnp.bfloat16):
    """x: (B, S, E) f32; w*: (E, E) pre-transposed (in, out); b*: (E,)."""
    B, S, E = x.shape
    scale = 1.0 / math.sqrt(E)

    tq = min(tq or 128, S)
    tk = min(tk or 128, S)
    assert S % tq == 0 and S % tk == 0, "sequence must be divisible by tiles"

    # Stack Q/K/V params: (3, E, E) weights in the MXU dtype, (3, 1, E) f32 biases.
    wqkv = jnp.stack([wq, wk, wv], axis=0).astype(mxu_dtype)
    bqkv = jnp.stack([bq, bk, bv], axis=0).reshape(3, 1, E).astype(jnp.float32)

    grid = (B, S // tq, S // tk)

    itemsize = x.dtype.itemsize
    cost = pl.CostEstimate(
        flops=B * (6 * S * E * E + 4 * S * S * E),
        transcendentals=B * S * S,
        bytes_accessed=(2 * B * S * E * itemsize                 # xq + xkv reads
                        + wqkv.size * wqkv.dtype.itemsize
                        + bqkv.size * 4
                        + B * S * E * itemsize),                 # output
    )

    kernel = functools.partial(_flash_attn_kernel, scale=scale, mxu_dtype=mxu_dtype)

    return pl.pallas_call(
        kernel,
        out_shape=jax.ShapeDtypeStruct((B, S, E), x.dtype),
        grid_spec=pltpu.PrefetchScalarGridSpec(
            num_scalar_prefetch=0,
            grid=grid,
            in_specs=[
                pl.BlockSpec((1, tq, E), lambda b, qi, ki: (b, qi, 0)),   # x (Q tile)
                pl.BlockSpec((1, tk, E), lambda b, qi, ki: (b, ki, 0)),   # x (K/V tile)
                pl.BlockSpec((3, E, E), lambda b, qi, ki: (0, 0, 0)),     # stacked Wqkv
                pl.BlockSpec((3, 1, E), lambda b, qi, ki: (0, 0, 0)),     # stacked biases
            ],
            out_specs=pl.BlockSpec((1, tq, E), lambda b, qi, ki: (b, qi, 0)),
            scratch_shapes=[
                pltpu.VMEM((tq, E), mxu_dtype),     # scaled Q tile (held over kv axis)
                pltpu.VMEM((tq, 1), jnp.float32),   # running max m
                pltpu.VMEM((tq, 1), jnp.float32),   # running denom l
                pltpu.VMEM((tq, E), jnp.float32),   # output accumulator
            ],
        ),
        compiler_params=pltpu.CompilerParams(
            dimension_semantics=("parallel", "parallel", "arbitrary"),
            vmem_limit_bytes=32 * 1024 * 1024),
        cost_estimate=cost,
    )(x, x, wqkv, bqkv)


def self_attention_ref(x, wq, bq, wk, bk, wv, bv):
    """Pure-JAX f32 reference matching the PyTorch forward."""
    E = x.shape[-1]
    q = x @ wq + bq
    k = x @ wk + bk
    v = x @ wv + bv
    scores = jnp.einsum("bqe,bke->bqk", q, k) / math.sqrt(E)
    attn = jax.nn.softmax(scores, axis=-1)
    return jnp.einsum("bqk,bke->bqe", attn, v)


if __name__ == "__main__":
    B, S, E = 2, 8, 32  # batch, seq, embed_dim

    key = jax.random.PRNGKey(0)
    kx, kq, kbq, kk, kbk, kv_, kbv = jax.random.split(key, 7)

    bound = 1.0 / math.sqrt(E)
    x = jax.random.normal(kx, (B, S, E), dtype=jnp.float32)
    wq = jax.random.uniform(kq, (E, E), jnp.float32, -bound, bound)
    bq = jax.random.uniform(kbq, (E,), jnp.float32, -bound, bound)
    wk = jax.random.uniform(kk, (E, E), jnp.float32, -bound, bound)
    bk = jax.random.uniform(kbk, (E,), jnp.float32, -bound, bound)
    wv = jax.random.uniform(kv_, (E, E), jnp.float32, -bound, bound)
    bv = jax.random.uniform(kbv, (E,), jnp.float32, -bound, bound)

    ref = self_attention_ref(x, wq, bq, wk, bk, wv, bv)

    # f32 MXU path: tight agreement with the reference (approx reciprocal only).
    out = self_attention_pallas(x, wq, bq, wk, bk, wv, bv, mxu_dtype=jnp.float32)
    out = jax.block_until_ready(out)
    assert out.shape == (B, S, E)
    assert jnp.allclose(out, ref, atol=5e-3, rtol=5e-3), "f32 path mismatch vs reference"

    # Default bf16-MXU path (perf configuration): loosened tolerance.
    out_bf16 = self_attention_pallas(x, wq, bq, wk, bk, wv, bv)
    out_bf16 = jax.block_until_ready(out_bf16)
    assert jnp.allclose(out_bf16, ref, atol=6e-2, rtol=6e-2), "bf16 path mismatch vs reference"

    print("KERNEL_OK")
</pallas_src>

<mosaic_0001>
module attributes {stable_mosaic.version = 11 : i64} {
  func.func @_flash_attn_kernel(%arg0: i32, %arg1: i32, %arg2: i32, %arg3: memref<1x8x32xf32, #tpu.memory_space<vmem>>, %arg4: memref<1x8x32xf32, #tpu.memory_space<vmem>>, %arg5: memref<3x32x32xf32, #tpu.memory_space<vmem>>, %arg6: memref<3x1x32xf32, #tpu.memory_space<vmem>>, %arg7: memref<1x8x32xf32, #tpu.memory_space<vmem>>, %arg8: memref<8x32xf32, #tpu.memory_space<vmem>>, %arg9: memref<8x1xf32, #tpu.memory_space<vmem>>, %arg10: memref<8x1xf32, #tpu.memory_space<vmem>>, %arg11: memref<8x32xf32, #tpu.memory_space<vmem>>) attributes {dimension_semantics = [#tpu.dimension_semantics<parallel>, #tpu.dimension_semantics<parallel>, #tpu.dimension_semantics<arbitrary>], iteration_bounds = array<i64: 2, 1, 1>, scalar_prefetch = 0 : i64, scratch_operands = 4 : i64, tpu.core_type = #tpu.core_type<tc>, window_params = [{transform_indices = @transform_0, window_bounds = array<i64: 1, 8, 32>}, {transform_indices = @transform_1, window_bounds = array<i64: 1, 8, 32>}, {pipeline_mode = #tpu.pipeline_mode<synchronous>, transform_indices = @transform_2, window_bounds = array<i64: 3, 32, 32>}, {pipeline_mode = #tpu.pipeline_mode<synchronous>, transform_indices = @transform_3, window_bounds = array<i64: 3, 1, 32>}, {transform_indices = @transform_4, window_bounds = array<i64: 1, 8, 32>}]} {
    %c0_i32 = arith.constant 0 : i32
    %0 = arith.cmpi eq, %arg2, %c0_i32 : i32
    %1 = arith.extui %0 : i1 to i32
    %c0_i32_0 = arith.constant 0 : i32
    %2 = arith.cmpi ne, %1, %c0_i32_0 : i32
    scf.if %2 {
      %c0_34 = arith.constant 0 : index
      %c0_35 = arith.constant 0 : index
      %c0_36 = arith.constant 0 : index
      %46 = vector.load %arg3[%c0_34, %c0_35, %c0_36] : memref<1x8x32xf32, #tpu.memory_space<vmem>>, vector<1x8x32xf32>
      %47 = vector.shape_cast %46 : vector<1x8x32xf32> to vector<8x32xf32>
      %c0_37 = arith.constant 0 : index
      %c0_38 = arith.constant 0 : index
      %c0_39 = arith.constant 0 : index
      %48 = vector.load %arg5[%c0_37, %c0_38, %c0_39] : memref<3x32x32xf32, #tpu.memory_space<vmem>>, vector<1x32x32xf32>
      %49 = vector.shape_cast %48 : vector<1x32x32xf32> to vector<32x32xf32>
      %cst_40 = arith.constant dense<0.000000e+00> : vector<8x32xf32>
      %50 = tpu.matmul %47, %49, %cst_40 {dimension_numbers = #tpu.dot_dimension_numbers<[1], [0], [0], [1], [0, 0, 1, 1], [], []>} : vector<8x32xf32>, vector<32x32xf32>, vector<8x32xf32> -> vector<8x32xf32>
      %c0_41 = arith.constant 0 : index
      %c0_42 = arith.constant 0 : index
      %c0_43 = arith.constant 0 : index
      %51 = vector.load %arg6[%c0_41, %c0_42, %c0_43] : memref<3x1x32xf32, #tpu.memory_space<vmem>>, vector<1x1x32xf32>
      %52 = vector.shape_cast %51 : vector<1x1x32xf32> to vector<1x32xf32>
      %53 = vector.broadcast %52 : vector<1x32xf32> to vector<8x32xf32>
      %54 = arith.addf %50, %53 : vector<8x32xf32>
      %cst_44 = arith.constant 0.176776692 : f32
      %55 = vector.broadcast %cst_44 : f32 to vector<8x32xf32>
      %56 = arith.mulf %54, %55 : vector<8x32xf32>
      %c0_45 = arith.constant 0 : index
      %c0_46 = arith.constant 0 : index
      %57 = vector.load %arg8[%c0_45, %c0_46] : memref<8x32xf32, #tpu.memory_space<vmem>>, vector<8x32xf32>
      tpu.vector_store %arg8[%c0_45, %c0_46], %56 {strides = array<i32>} : memref<8x32xf32, #tpu.memory_space<vmem>>, vector<8x32xf32>,
      %cst_47 = arith.constant 0xFF800000 : f32
      %58 = vector.broadcast %cst_47 : f32 to vector<8x1xf32>
      %c0_48 = arith.constant 0 : index
      %c0_49 = arith.constant 0 : index
      %59 = vector.load %arg9[%c0_48, %c0_49] : memref<8x1xf32, #tpu.memory_space<vmem>>, vector<8x1xf32>
      tpu.vector_store %arg9[%c0_48, %c0_49], %58 {strides = array<i32>} : memref<8x1xf32, #tpu.memory_space<vmem>>, vector<8x1xf32>,
      %cst_50 = arith.constant 0.000000e+00 : f32
      %60 = vector.broadcast %cst_50 : f32 to vector<8x1xf32>
      %c0_51 = arith.constant 0 : index
      %c0_52 = arith.constant 0 : index
      %61 = vector.load %arg10[%c0_51, %c0_52] : memref<8x1xf32, #tpu.memory_space<vmem>>, vector<8x1xf32>
      tpu.vector_store %arg10[%c0_51, %c0_52], %60 {strides = array<i32>} : memref<8x1xf32, #tpu.memory_space<vmem>>, vector<8x1xf32>,
      %cst_53 = arith.constant 0.000000e+00 : f32
      %62 = vector.broadcast %cst_53 : f32 to vector<8x32xf32>
      %c0_54 = arith.constant 0 : index
      %c0_55 = arith.constant 0 : index
      %63 = vector.load %arg11[%c0_54, %c0_55] : memref<8x32xf32, #tpu.memory_space<vmem>>, vector<8x32xf32>
      tpu.vector_store %arg11[%c0_54, %c0_55], %62 {strides = array<i32>} : memref<8x32xf32, #tpu.memory_space<vmem>>, vector<8x32xf32>,
    } else {
    }
    %c0 = arith.constant 0 : index
    %c0_1 = arith.constant 0 : index
    %c0_2 = arith.constant 0 : index
    %3 = vector.load %arg4[%c0, %c0_1, %c0_2] : memref<1x8x32xf32, #tpu.memory_space<vmem>>, vector<1x8x32xf32>
    %4 = vector.shape_cast %3 : vector<1x8x32xf32> to vector<8x32xf32>
    %c1 = arith.constant 1 : index
    %c0_3 = arith.constant 0 : index
    %c0_4 = arith.constant 0 : index
    %5 = vector.load %arg5[%c1, %c0_3, %c0_4] : memref<3x32x32xf32, #tpu.memory_space<vmem>>, vector<1x32x32xf32>
    %6 = vector.shape_cast %5 : vector<1x32x32xf32> to vector<32x32xf32>
    %cst = arith.constant dense<0.000000e+00> : vector<8x32xf32>
    %7 = tpu.matmul %4, %6, %cst {dimension_numbers = #tpu.dot_dimension_numbers<[1], [0], [0], [1], [0, 0, 1, 1], [], []>} : vector<8x32xf32>, vector<32x32xf32>, vector<8x32xf32> -> vector<8x32xf32>
    %c1_5 = arith.constant 1 : index
    %c0_6 = arith.constant 0 : index
    %c0_7 = arith.constant 0 : index
    %8 = vector.load %arg6[%c1_5, %c0_6, %c0_7] : memref<3x1x32xf32, #tpu.memory_space<vmem>>, vector<1x1x32xf32>
    %9 = vector.shape_cast %8 : vector<1x1x32xf32> to vector<1x32xf32>
    %10 = vector.broadcast %9 : vector<1x32xf32> to vector<8x32xf32>
    %11 = arith.addf %7, %10 : vector<8x32xf32>
    %c2 = arith.constant 2 : index
    %c0_8 = arith.constant 0 : index
    %c0_9 = arith.constant 0 : index
    %12 = vector.load %arg5[%c2, %c0_8, %c0_9] : memref<3x32x32xf32, #tpu.memory_space<vmem>>, vector<1x32x32xf32>
    %13 = vector.shape_cast %12 : vector<1x32x32xf32> to vector<32x32xf32>
    %cst_10 = arith.constant dense<0.000000e+00> : vector<8x32xf32>
    %14 = tpu.matmul %4, %13, %cst_10 {dimension_numbers = #tpu.dot_dimension_numbers<[1], [0], [0], [1], [0, 0, 1, 1], [], []>} : vector<8x32xf32>, vector<32x32xf32>, vector<8x32xf32> -> vector<8x32xf32>
    %c2_11 = arith.constant 2 : index
    %c0_12 = arith.constant 0 : index
    %c0_13 = arith.constant 0 : index
    %15 = vector.load %arg6[%c2_11, %c0_12, %c0_13] : memref<3x1x32xf32, #tpu.memory_space<vmem>>, vector<1x1x32xf32>
    %16 = vector.shape_cast %15 : vector<1x1x32xf32> to vector<1x32xf32>
    %17 = vector.broadcast %16 : vector<1x32xf32> to vector<8x32xf32>
    %18 = arith.addf %14, %17 : vector<8x32xf32>
    %c0_14 = arith.constant 0 : index
    %c0_15 = arith.constant 0 : index
    %19 = vector.load %arg8[%c0_14, %c0_15] : memref<8x32xf32, #tpu.memory_space<vmem>>, vector<8x32xf32>
    %cst_16 = arith.constant dense<0.000000e+00> : vector<8x8xf32>
    %20 = tpu.matmul %19, %11, %cst_16 {dimension_numbers = #tpu.dot_dimension_numbers<[1], [1], [0], [0], [0, 0, 1, 0], [], []>} : vector<8x32xf32>, vector<8x32xf32>, vector<8x8xf32> -> vector<8x8xf32>
    %c0_17 = arith.constant 0 : index
    %c0_18 = arith.constant 0 : index
    %21 = vector.load %arg9[%c0_17, %c0_18] : memref<8x1xf32, #tpu.memory_space<vmem>>, vector<8x1xf32>
    %cst_19 = arith.constant dense<0xFF800000> : vector<8xf32>
    %22 = vector.multi_reduction <maximumf>, %20, %cst_19 [1] : vector<8x8xf32> to vector<8xf32>
    %23 = vector.shape_cast %22 : vector<8xf32> to vector<8x1xf32>
    %24 = arith.maximumf %21, %23 : vector<8x1xf32>
    %25 = arith.subf %21, %24 : vector<8x1xf32>
    %26 = math.exp %25 : vector<8x1xf32>
    %27 = vector.broadcast %24 : vector<8x1xf32> to vector<8x8xf32>
    %28 = arith.subf %20, %27 : vector<8x8xf32>
    %29 = math.exp %28 : vector<8x8xf32>
    %c0_20 = arith.constant 0 : index
    %c0_21 = arith.constant 0 : index
    %30 = vector.load %arg10[%c0_20, %c0_21] : memref<8x1xf32, #tpu.memory_space<vmem>>, vector<8x1xf32>
    %31 = arith.mulf %26, %30 : vector<8x1xf32>
    %cst_22 = arith.constant dense<0.000000e+00> : vector<8xf32>
    %32 = vector.multi_reduction <add>, %29, %cst_22 [1] : vector<8x8xf32> to vector<8xf32>
    %33 = vector.shape_cast %32 : vector<8xf32> to vector<8x1xf32>
    %34 = arith.addf %31, %33 : vector<8x1xf32>
    %c0_23 = arith.constant 0 : index
    %c0_24 = arith.constant 0 : index
    %35 = vector.load %arg10[%c0_23, %c0_24] : memref<8x1xf32, #tpu.memory_space<vmem>>, vector<8x1xf32>
    tpu.vector_store %arg10[%c0_23, %c0_24], %34 {strides = array<i32>} : memref<8x1xf32, #tpu.memory_space<vmem>>, vector<8x1xf32>,
    %c0_25 = arith.constant 0 : index
    %c0_26 = arith.constant 0 : index
    %36 = vector.load %arg11[%c0_25, %c0_26] : memref<8x32xf32, #tpu.memory_space<vmem>>, vector<8x32xf32>
    %37 = vector.broadcast %26 : vector<8x1xf32> to vector<8x32xf32>
    %38 = arith.mulf %37, %36 : vector<8x32xf32>
    %cst_27 = arith.constant dense<0.000000e+00> : vector<8x32xf32>
    %39 = tpu.matmul %29, %18, %cst_27 {dimension_numbers = #tpu.dot_dimension_numbers<[1], [0], [0], [1], [0, 0, 1, 1], [], []>} : vector<8x8xf32>, vector<8x32xf32>, vector<8x32xf32> -> vector<8x32xf32>
    %40 = arith.addf %38, %39 : vector<8x32xf32>
    %c0_28 = arith.constant 0 : index
    %c0_29 = arith.constant 0 : index
    %41 = vector.load %arg11[%c0_28, %c0_29] : memref<8x32xf32, #tpu.memory_space<vmem>>, vector<8x32xf32>
    tpu.vector_store %arg11[%c0_28, %c0_29], %40 {strides = array<i32>} : memref<8x32xf32, #tpu.memory_space<vmem>>, vector<8x32xf32>,
    %c0_30 = arith.constant 0 : index
    %c0_31 = arith.constant 0 : index
    %42 = vector.load %arg9[%c0_30, %c0_31] : memref<8x1xf32, #tpu.memory_space<vmem>>, vector<8x1xf32>
    tpu.vector_store %arg9[%c0_30, %c0_31], %24 {strides = array<i32>} : memref<8x1xf32, #tpu.memory_space<vmem>>, vector<8x1xf32>,
    %c0_i32_32 = arith.constant 0 : i32
    %43 = arith.cmpi eq, %arg2, %c0_i32_32 : i32
    %44 = arith.extui %43 : i1 to i32
    %c0_i32_33 = arith.constant 0 : i32
    %45 = arith.cmpi ne, %44, %c0_i32_33 : i32
    scf.if %45 {
      %c0_34 = arith.constant 0 : index
      %c0_35 = arith.constant 0 : index
      %46 = vector.load %arg10[%c0_34, %c0_35] : memref<8x1xf32, #tpu.memory_space<vmem>>, vector<8x1xf32>
      %47 = tpu.reciprocal %46 {approx = true} : vector<8x1xf32> -> vector<8x1xf32>
      %c0_36 = arith.constant 0 : index
      %c0_37 = arith.constant 0 : index
      %48 = vector.load %arg11[%c0_36, %c0_37] : memref<8x32xf32, #tpu.memory_space<vmem>>, vector<8x32xf32>
      %49 = vector.broadcast %47 : vector<8x1xf32> to vector<8x32xf32>
      %50 = arith.mulf %48, %49 : vector<8x32xf32>
      %c0_38 = arith.constant 0 : index
      %c0_39 = arith.constant 0 : index
      %c0_40 = arith.constant 0 : index
      %51 = vector.load %arg7[%c0_38, %c0_39, %c0_40] : memref<1x8x32xf32, #tpu.memory_space<vmem>>, vector<1x8x32xf32>
      %52 = vector.shape_cast %51 : vector<1x8x32xf32> to vector<8x32xf32>
      %53 = vector.shape_cast %50 : vector<8x32xf32> to vector<1x8x32xf32>
      tpu.vector_store %arg7[%c0_38, %c0_39, %c0_40], %53 {strides = array<i32>} : memref<1x8x32xf32, #tpu.memory_space<vmem>>, vector<1x8x32xf32>,
    } else {
    }
    return
  }
  func.func @transform_0(%arg0: i32, %arg1: i32, %arg2: i32) -> (i32, i32, i32) {
    %c0_i32 = arith.constant 0 : i32
    %c0_i32_0 = arith.constant 0 : i32
    return %arg0, %arg1, %c0_i32 : i32, i32, i32
  }
  func.func @transform_1(%arg0: i32, %arg1: i32, %arg2: i32) -> (i32, i32, i32) {
    %c0_i32 = arith.constant 0 : i32
    %c0_i32_0 = arith.constant 0 : i32
    return %arg0, %arg2, %c0_i32 : i32, i32, i32
  }
  func.func @transform_2(%arg0: i32, %arg1: i32, %arg2: i32) -> (i32, i32, i32) {
    %c0_i32 = arith.constant 0 : i32
    %c0_i32_0 = arith.constant 0 : i32
    %c0_i32_1 = arith.constant 0 : i32
    %c0_i32_2 = arith.constant 0 : i32
    return %c0_i32, %c0_i32_0, %c0_i32_1 : i32, i32, i32
  }
  func.func @transform_3(%arg0: i32, %arg1: i32, %arg2: i32) -> (i32, i32, i32) {
    %c0_i32 = arith.constant 0 : i32
    %c0_i32_0 = arith.constant 0 : i32
    %c0_i32_1 = arith.constant 0 : i32
    %c0_i32_2 = arith.constant 0 : i32
    return %c0_i32, %c0_i32_0, %c0_i32_1 : i32, i32, i32
  }
  func.func @transform_4(%arg0: i32, %arg1: i32, %arg2: i32) -> (i32, i32, i32) {
    %c0_i32 = arith.constant 0 : i32
    %c0_i32_0 = arith.constant 0 : i32
    return %arg0, %arg1, %c0_i32 : i32, i32, i32
  }
}

</mosaic_0001>

<llo_original>
// kernel: tpu_custom_call.1
$region0: #{tpu_custom_call.1}
  #allocation0 [shape = 'u32[]', space=smem, size = 0x4, offset = 0x4, fixed_abs, tag = 'smem constant byte address 0x4 - core index']
  #allocation1 [shape = 'u32[144,128]{1,0:T(1,128)}', space=vmem, size = 0x12000, scoped, tag = 'internal scratch']
  #allocation2 [shape = 'f32[8,32]{1,0:T(8,128)}', space=vmem, size = 0x1000, scoped, tag = 'scratch operand']
  #allocation3 [shape = 'f32[8,1]{1,0:T(8,128)}', space=vmem, size = 0x1000, scoped, tag = 'scratch operand']
  #allocation4 [shape = 'f32[8,1]{1,0:T(8,128)}', space=vmem, size = 0x1000, scoped, tag = 'scratch operand']
  #allocation5 [shape = 'f32[8,32]{1,0:T(8,128)}', space=vmem, size = 0x1000, scoped, tag = 'scratch operand']
  %s0 = inlined_call_operand.hbm [shape: f32[2,8,32], index: 0, kind: input, shape index: {}]
  %s1 = inlined_call_operand.hbm [shape: f32[2,8,32], index: 1, kind: input, shape index: {}]
  %s2 = inlined_call_operand.hbm [shape: f32[3,32,32], index: 2, kind: input, shape index: {}]
  %s3 = inlined_call_operand.vmem [shape: f32[3,1,32], index: 3, kind: input, shape index: {}]
  %s4 = inlined_call_operand.hbm [shape: f32[2,8,32], index: 4, kind: output, shape index: {}]
  %s5 = sld [smem:[#allocation0]]
  $region69: #{tpu_custom_call.1} parent=0
    _
  %s7 = ssub.s32 1, %s5
  %s8 = scalar_select 0, %s7, %s5
  $region1: #{tpu_custom_call.1} parent=0
    #allocation6 [shape = 'u8[8192]{0}', space=vmem, size = 0x2000, scoped, tag = 'input window, operand 0']
    #allocation7 [shape = 's32[2]{0}', space=sflag, size = 0x8, scoped, tag = 'scoped memory for tpu_custom_call.1']
    #allocation8 [shape = 's32[2]{0}', space=sflag, size = 0x8, scoped, tag = 'scoped memory for tpu_custom_call.1']
    #allocation9 [shape = 'u8[8192]{0}', space=vmem, size = 0x2000, scoped, tag = 'input window, operand 1']
    #allocation10 [shape = 's32[2]{0}', space=sflag, size = 0x8, scoped, tag = 'scoped memory for tpu_custom_call.1']
    #allocation11 [shape = 'u8[49152]{0}', space=vmem, size = 0xc000, scoped, tag = 'input window, operand 2, single buffered']
    #allocation12 [shape = 'u8[8192]{0}', space=vmem, size = 0x2000, scoped, tag = 'output window, operand 0']
    %9 = vsyncpa [#allocation7], 0
    %s10 = scalar_lea.sflag [#allocation7], 1
    %11 = vsyncpa %s10, 0
    %12 = vsyncpa [#allocation10], 0
    %s13 = scalar_lea.sflag [#allocation10], 1
    %14 = vsyncpa %s13, 0
    %15 = vsyncpa [#allocation8], 0
    %s16 = scalar_lea.sflag [#allocation8], 1
    %17 = vsyncpa %s16, 0
    loop: start=0, step=1, limit=4
    $region2: #{tpu_custom_call.1} parent=1 // loop_pre_header
      _
    $region3: #{tpu_custom_call.1} parent=1 // loop_header
      %s19 = sphi 0, %s23
      %p20 = scmp.ge.s32.totalorder %s19, 4
      %s26 = sphi 0, %s45
      %s27 = sphi 0, %s41
      %s28 = sphi 0, %s37
      %s29 = sphi 0, %s26
      %s30 = sphi 0, %s27
      %s31 = sphi 0, %s28
      %s32 = sphi 0, %s29
      %s33 = sphi 0, %s30
      %s34 = sphi 0, %s31
      %s50 = sphi 0, %s52
      %s53 = sphi 0, %s50
      %s54 = sphi 0, %s53
      %s70 = sphi 0, %s54
      %s78 = sphi 0, %s80
      %s81 = sphi 0, %s78
      %s82 = sphi 0, %s81
      %s98 = sphi 0, %s82
      %s102 = sphi 0, %s102
      %s104 = sphi 0, %s102
      %s105 = sphi 0, %s104
      %s119 = sphi 0, %s105
      %s123 = sphi 0, %s123
      %s125 = sphi 0, %s123
      %s126 = sphi 0, %s125
      %s140 = sphi 0, %s126
      %s148 = sphi 0, %s150
      %s151 = sphi 0, %s148
      %s152 = sphi 0, %s151
      %s168 = sphi 0, %s152
    $region4: #{tpu_custom_call.1} parent=1 // loop_header_branch
      %22 = sbr.rel (%p20) target = $region8
    $region5: #{tpu_custom_call.1} parent=1 // loop_body
      %s24 = ssub.s32 %s19, 1
      %s25 = ssub.s32 %s19, 2
      %s35 = sadd.s32 1, %s28
      %p36 = scmp.ge.s32.totalorder %s35, 1
      %s37 = scalar_select %p36, 0, %s35
      %s38 = sadd.s32 1, %s27
      %s39 = scalar_select %p36, %s38, %s27
      %p40 = scmp.ge.s32.totalorder %s39, 1
      %s41 = scalar_select %p40, 0, %s39
      %s42 = sadd.s32 1, %s26
      %s43 = scalar_select %p40, %s42, %s26
      %p44 = scmp.ge.s32.totalorder %s43, 2
      %s45 = scalar_select %p44, 0, %s43
      %s46 = ssub.s32 %s26, %s45
      %s47 = ssub.s32 %s27, %s41
      %s48 = sor.u32 %s46, %s47
      %p49 = scmp.eq.s32.totalorder %s48, 0
      %s51 = sadd.s32 %s50, 1
      %s52 = scalar_select %p49, %s50, %s51
      %p55 = pneg %p49
      %p56 = scmp.eq.s32.totalorder %s19, 1
      %p57 = por %p55, %p56
      %p58 = scmp.ne.s32.totalorder %s50, %s53
      %p59 = scmp.eq.s32.totalorder %s19, 0
      %p60 = por %p58, %p59
      %p61 = scmp.ne.s32.totalorder %s50, %s53
      %p62 = scmp.eq.s32.totalorder %s24, 1
      %p63 = por %p61, %p62
      %p64 = scmp.ne.s32.totalorder %s53, %s54
      %p65 = scmp.eq.s32.totalorder %s24, 0
      %p66 = por %p64, %p65
      %p67 = scmp.ne.s32.totalorder %s53, %s54
      %p68 = scmp.eq.s32.totalorder %s25, 1
      %p69 = por %p67, %p68
      %p71 = scmp.ne.s32.totalorder %s54, %s70
      %p72 = scmp.eq.s32.totalorder %s25, 0
      %p73 = por %p71, %p72
      %s74 = ssub.s32 %s26, %s45
      %s75 = ssub.s32 %s28, %s37
      %s76 = sor.u32 %s74, %s75
      %p77 = scmp.eq.s32.totalorder %s76, 0
      %s79 = sadd.s32 %s78, 1
      %s80 = scalar_select %p77, %s78, %s79
      %p83 = pneg %p77
      %p84 = scmp.eq.s32.totalorder %s19, 1
      %p85 = por %p83, %p84
      %p86 = scmp.ne.s32.totalorder %s78, %s81
      %p87 = scmp.eq.s32.totalorder %s19, 0
      %p88 = por %p86, %p87
      %p89 = scmp.ne.s32.totalorder %s78, %s81
      %p90 = scmp.eq.s32.totalorder %s24, 1
      %p91 = por %p89, %p90
      %p92 = scmp.ne.s32.totalorder %s81, %s82
      %p93 = scmp.eq.s32.totalorder %s24, 0
      %p94 = por %p92, %p93
      %p95 = scmp.ne.s32.totalorder %s81, %s82
      %p96 = scmp.eq.s32.totalorder %s25, 1
      %p97 = por %p95, %p96
      %p99 = scmp.ne.s32.totalorder %s82, %s98
      %p100 = scmp.eq.s32.totalorder %s25, 0
      %p101 = por %p99, %p100
      %s103 = sadd.s32 %s102, 1
      %p106 = scmp.eq.s32.totalorder %s19, 1
      %p107 = scmp.ne.s32.totalorder %s102, %s104
      %p108 = scmp.eq.s32.totalorder %s19, 0
      %p109 = por %p107, %p108
      %p110 = scmp.ne.s32.totalorder %s102, %s104
      %p111 = scmp.eq.s32.totalorder %s24, 1
      %p112 = por %p110, %p111
      %p113 = scmp.ne.s32.totalorder %s104, %s105
      %p114 = scmp.eq.s32.totalorder %s24, 0
      %p115 = por %p113, %p114
      %p116 = scmp.ne.s32.totalorder %s104, %s105
      %p117 = scmp.eq.s32.totalorder %s25, 1
      %p118 = por %p116, %p117
      %p120 = scmp.ne.s32.totalorder %s105, %s119
      %p121 = scmp.eq.s32.totalorder %s25, 0
      %p122 = por %p120, %p121
      %s124 = sadd.s32 %s123, 1
      %p127 = scmp.eq.s32.totalorder %s19, 1
      %p128 = scmp.ne.s32.totalorder %s123, %s125
      %p129 = scmp.eq.s32.totalorder %s19, 0
      %p130 = por %p128, %p129
      %p131 = scmp.ne.s32.totalorder %s123, %s125
      %p132 = scmp.eq.s32.totalorder %s24, 1
      %p133 = por %p131, %p132
      %p134 = scmp.ne.s32.totalorder %s125, %s126
      %p135 = scmp.eq.s32.totalorder %s24, 0
      %p136 = por %p134, %p135
      %p137 = scmp.ne.s32.totalorder %s125, %s126
      %p138 = scmp.eq.s32.totalorder %s25, 1
      %p139 = por %p137, %p138
      %p141 = scmp.ne.s32.totalorder %s126, %s140
      %p142 = scmp.eq.s32.totalorder %s25, 0
      %p143 = por %p141, %p142
      %s144 = ssub.s32 %s26, %s45
      %s145 = ssub.s32 %s27, %s41
      %s146 = sor.u32 %s144, %s145
      %p147 = scmp.eq.s32.totalorder %s146, 0
      %s149 = sadd.s32 %s148, 1
      %s150 = scalar_select %p147, %s148, %s149
      %p153 = pneg %p147
      %p154 = scmp.eq.s32.totalorder %s19, 1
      %p155 = por %p153, %p154
      %p156 = scmp.ne.s32.totalorder %s148, %s151
      %p157 = scmp.eq.s32.totalorder %s19, 0
      %p158 = por %p156, %p157
      %p159 = scmp.ne.s32.totalorder %s148, %s151
      %p160 = scmp.eq.s32.totalorder %s24, 1
      %p161 = por %p159, %p160
      %p162 = scmp.ne.s32.totalorder %s151, %s152
      %p163 = scmp.eq.s32.totalorder %s24, 0
      %p164 = por %p162, %p163
      %p165 = scmp.ne.s32.totalorder %s151, %s152
      %p166 = scmp.eq.s32.totalorder %s25, 1
      %p167 = por %p165, %p166
      %p169 = scmp.ne.s32.totalorder %s152, %s168
      %p170 = scmp.eq.s32.totalorder %s25, 0
      %p171 = por %p169, %p170
      %p172 = scmp.le.s32.totalorder 1, %s19
      %p173 = scmp.lt.s32.totalorder %s19, 3
      %p174 = pnand %p172, %p173
      %p175 = pneg %p174
      // Predicated region
      $region9: #{tpu_custom_call.1} parent=5 // pred_check
        _
      $region10: #{tpu_custom_call.1} parent=5 // pred_check_branch
        %177 = sbr.rel (%p174) target = $region12
      $region11: #{tpu_custom_call.1} parent=5 // pred_region
        %s178 = ssub.s32 %s19, 1
        // Predicated region
        $region13: #{tpu_custom_call.1} parent=11 // pred_check
          %p179 = pneg %p115
        $region14: #{tpu_custom_call.1} parent=11 // pred_check_branch
          %181 = sbr.rel (%p179) target = $region16
        $region15: #{tpu_custom_call.1} parent=11 // pred_region
          %s183 = ssub.s32 1536, 1536
          %184 = vsyncadd [#allocation10], %s183
          %s185 = sshll.u32 [#allocation11], 4
          %s186 = int_to_ptr.vmem [resolvable:$true] %s185
          %191 = dma.hbm_to_vmem [thread:$0]  %s2, 1536, %s186, [#allocation10], 128, 128, 8
        $region16: #{tpu_custom_call.1} parent=11 // pred_fallthru
          _
        // Predicated region
        $region17: #{tpu_custom_call.1} parent=11 // pred_check
          %p192 = pneg %p136
        $region18: #{tpu_custom_call.1} parent=11 // pred_check_branch
          %194 = sbr.rel (%p192) target = $region20
        $region19: #{tpu_custom_call.1} parent=11 // pred_region
          _
        $region20: #{tpu_custom_call.1} parent=11 // pred_fallthru
          _
      $region12: #{tpu_custom_call.1} parent=5 // pred_fallthru
        _
      %p195 = scmp.lt.s32.totalorder %s19, 2
      // Predicated region
      $region21: #{tpu_custom_call.1} parent=5 // pred_check
        %p196 = pneg %p195
      $region22: #{tpu_custom_call.1} parent=5 // pred_check_branch
        %198 = sbr.rel (%p196) target = $region24
      $region23: #{tpu_custom_call.1} parent=5 // pred_region
        // Predicated region
        $region25: #{tpu_custom_call.1} parent=23 // pred_check
          %p199 = pneg %p60
        $region26: #{tpu_custom_call.1} parent=23 // pred_check_branch
          %201 = sbr.rel (%p199) target = $region28
        $region27: #{tpu_custom_call.1} parent=23 // pred_region
          %s202 = sand.u32 %s50, 1
          %s203 = scalar_lea.sflag [#allocation7], %s202
          %s204 = sand.u32 %s50, 1
          %s205 = smul.addr %s204, 8
          %s206 = scalar_lea.vmem [#allocation6], %s205
          %s208 = ssub.s32 128, 128
          %209 = vsyncadd %s203, %s208
          %s210 = sadd.s32 %s27, %s26
          %s211 = smul.addr %s210, 128
          %s212 = scalar_lea.hbm %s0, %s211
          %s214 = sshll.u32 %s206, 4
          %s215 = int_to_ptr.vmem [resolvable:$true] %s214
          %217 = dma.hbm_to_vmem [thread:$0]  %s212, 128, %s215, %s203
        $region28: #{tpu_custom_call.1} parent=23 // pred_fallthru
          _
        // Predicated region
        $region29: #{tpu_custom_call.1} parent=23 // pred_check
          %p218 = pneg %p88
        $region30: #{tpu_custom_call.1} parent=23 // pred_check_branch
          %220 = sbr.rel (%p218) target = $region32
        $region31: #{tpu_custom_call.1} parent=23 // pred_region
          %s221 = sand.u32 %s19, 1
          %s222 = scalar_lea.sflag [#allocation10], %s221
          %s223 = sand.u32 %s78, 1
          %s224 = smul.addr %s223, 8
          %s225 = scalar_lea.vmem [#allocation9], %s224
          %s227 = ssub.s32 128, 128
          %228 = vsyncadd %s222, %s227
          %s229 = sadd.s32 %s28, %s26
          %s230 = smul.addr %s229, 128
          %s231 = scalar_lea.hbm %s1, %s230
          %s233 = sshll.u32 %s225, 4
          %s234 = int_to_ptr.vmem [resolvable:$true] %s233
          %236 = dma.hbm_to_vmem [thread:$0]  %s231, 128, %s234, %s222
        $region32: #{tpu_custom_call.1} parent=23 // pred_fallthru
          _
      $region24: #{tpu_custom_call.1} parent=5 // pred_fallthru
        _
      %p237 = scmp.le.s32.totalorder 1, %s19
      %p238 = scmp.lt.s32.totalorder %s19, 3
      %p239 = pnand %p237, %p238
      %p240 = pneg %p239
      // Predicated region
      $region33: #{tpu_custom_call.1} parent=5 // pred_check
        _
      $region34: #{tpu_custom_call.1} parent=5 // pred_check_branch
        %242 = sbr.rel (%p239) target = $region36
      $region35: #{tpu_custom_call.1} parent=5 // pred_region
        %s243 = ssub.s32 %s19, 1
        %s244 = sand.u32 %s53, 1
        %s245 = scalar_lea.sflag [#allocation7], %s244
        %s246 = sand.u32 %s53, 1
        %s247 = smul.addr %s246, 8
        %s248 = scalar_lea.vmem [#allocation6], %s247
        // Predicated region
        $region37: #{tpu_custom_call.1} parent=35 // pred_check
          %p249 = pneg %p66
        $region38: #{tpu_custom_call.1} parent=35 // pred_check_branch
          %251 = sbr.rel (%p249) target = $region40
        $region39: #{tpu_custom_call.1} parent=35 // pred_region
          %252 = dma.done %s245, 128
        $region40: #{tpu_custom_call.1} parent=35 // pred_fallthru
          _
        %s253 = sand.u32 %s24, 1
        %s254 = scalar_lea.sflag [#allocation10], %s253
        %s255 = sand.u32 %s81, 1
        %s256 = smul.addr %s255, 8
        %s257 = scalar_lea.vmem [#allocation9], %s256
        // Predicated region
        $region41: #{tpu_custom_call.1} parent=35 // pred_check
          %p258 = pneg %p94
        $region42: #{tpu_custom_call.1} parent=35 // pred_check_branch
          %260 = sbr.rel (%p258) target = $region44
        $region43: #{tpu_custom_call.1} parent=35 // pred_region
          %261 = dma.done %s254, 128
        $region44: #{tpu_custom_call.1} parent=35 // pred_fallthru
          _
        // Predicated region
        $region45: #{tpu_custom_call.1} parent=35 // pred_check
          %p262 = pneg %p115
        $region46: #{tpu_custom_call.1} parent=35 // pred_check_branch
          %264 = sbr.rel (%p262) target = $region48
        $region47: #{tpu_custom_call.1} parent=35 // pred_region
          %265 = dma.done [#allocation10], 1536
        $region48: #{tpu_custom_call.1} parent=35 // pred_fallthru
          _
        %s266 = sand.u32 %s53, 1
        %s267 = scalar_lea.sflag [#allocation7], %s266
        %s268 = sand.u32 %s53, 1
        %s269 = smul.addr %s268, 8
        %s270 = scalar_lea.vmem [#allocation6], %s269
        %p271 = pneg %p66
        %p272 = pneg %p63
        %s273 = sand.u32 %s24, 1
        %s274 = scalar_lea.sflag [#allocation10], %s273
        %s275 = sand.u32 %s81, 1
        %s276 = smul.addr %s275, 8
        %s277 = scalar_lea.vmem [#allocation9], %s276
        %p278 = pneg %p94
        %p279 = pneg %p91
        %p280 = pneg %p115
        %p281 = pneg %p112
        %p282 = pneg %p136
        %p283 = pneg %p133
        %p284 = pneg %p164
        %p285 = pneg %p161
        %s286 = sand.u32 %s151, 1
        %s287 = scalar_lea.sflag [#allocation8], %s286
        %s288 = sand.u32 %s151, 1
        %s289 = smul.addr %s288, 8
        %s290 = scalar_lea.vmem [#allocation12], %s289
        %p291 = scmp.eq.s32.totalorder %s31, 0
        // Predicated region
        $region49: #{tpu_custom_call.1} parent=35 // pred_check
          %p292 = pneg %p291
        $region50: #{tpu_custom_call.1} parent=35 // pred_check_branch
          %294 = sbr.rel (%p292) target = $region52
        $region51: #{tpu_custom_call.1} parent=35 // pred_region
          %v295 = vld [vmem:[%s248] sm:$0xff]
          %v296 = vld [vmem:[#allocation11] sm:$0xff]
          %v297 = vld [vmem:[#allocation11 + $0x8] sm:$0xff]
          %v298 = vld [vmem:[#allocation11 + $0x10] sm:$0xff]
          %v299 = vld [vmem:[#allocation11 + $0x18] sm:$0xff]
          %v300 = vld [vmem:[%s3] sm:$0x1]
          %v302 = vlaneseq
          %v303 = vshrl.u32 %v302, 7
          %v304 = vsub.s32 0, %v303
          %v305 = vrot.slane %v300, %v304
          %vm307 = vcmask 261120
          %v309 = vsel %vm307, %v295, 0
          %311 = vmatprep.subr.mxu0 0.0
          %312 = vmatpush1.msra.mxu0 0.0
          %313 = vmatprep.subr.mxu0 0.0
          %314 = vmatpush1.msra.mxu0 0.0
          %315 = vmatprep.subr.mxu0 0.0
          %316 = vmatpush1.msra.mxu0 0.0
          %317 = vmatprep.subr.mxu0 0.0
          %318 = vmatpush1.msra.mxu0 0.0
          %319 = vmatprep.subr.mxu0 0.0
          %320 = vmatpush1.msra.mxu0 0.0
          %321 = vmatprep.subr.mxu0 0.0
          %322 = vmatpush1.msra.mxu0 0.0
          %323 = vmatprep.subr.mxu0 0.0
          %324 = vmatpush1.msra.mxu0 0.0
          %325 = vmatprep.subr.mxu0 0.0
          %326 = vmatpush1.msra.mxu0 0.0
          %327 = vmatprep.subr.mxu0 0.0
          %328 = vmatpush1.msra.mxu0 0.0
          %329 = vmatprep.subr.mxu0 0.0
          %330 = vmatpush1.msra.mxu0 0.0
          %331 = vmatprep.subr.mxu0 0.0
          %332 = vmatpush1.msra.mxu0 0.0
          %333 = vmatprep.subr.mxu0 0.0
          %334 = vmatpush1.msra.mxu0 0.0
          %335 = vmatprep.subr.mxu0 0.0
          %336 = vmatpush1.msra.mxu0 %v299
          %337 = vmatprep.subr.mxu0 0.0
          %338 = vmatpush1.msra.mxu0 %v298
          %339 = vmatprep.subr.mxu0 0.0
          %340 = vmatpush1.msra.mxu0 %v297
          %341 = vmatprep.subr.mxu0 0.0
          %342 = vmatpush1.msra.mxu0 %v296
          %343 = vmatprep.subr.mxu0 0.0
          %344 = vmatpush2.msra.mxu0 0.0
          %345 = vmatprep.subr.mxu0 0.0
          %346 = vmatpush2.msra.mxu0 0.0
          %347 = vmatprep.subr.mxu0 0.0
          %348 = vmatpush2.msra.mxu0 0.0
          %349 = vmatprep.subr.mxu0 0.0
          %350 = vmatpush2.msra.mxu0 0.0
          %351 = vmatprep.subr.mxu0 0.0
          %352 = vmatpush2.msra.mxu0 0.0
          %353 = vmatprep.subr.mxu0 0.0
          %354 = vmatpush2.msra.mxu0 0.0
          %355 = vmatprep.subr.mxu0 0.0
          %356 = vmatpush2.msra.mxu0 0.0
          %357 = vmatprep.subr.mxu0 0.0
          %358 = vmatpush2.msra.mxu0 0.0
          %359 = vmatprep.subr.mxu0 0.0
          %360 = vmatpush2.msra.mxu0 0.0
          %361 = vmatprep.subr.mxu0 0.0
          %362 = vmatpush2.msra.mxu0 0.0
          %363 = vmatprep.subr.mxu0 0.0
          %364 = vmatpush2.msra.mxu0 0.0
          %365 = vmatprep.subr.mxu0 0.0
          %366 = vmatpush2.msra.mxu0 0.0
          %367 = vmatprep.subr.mxu0 0.0
          %368 = vmatpush2.msra.mxu0 0.0
          %369 = vmatprep.subr.mxu0 0.0
          %370 = vmatpush2.msra.mxu0 0.0
          %371 = vmatprep.subr.mxu0 0.0
          %372 = vmatpush2.msra.mxu0 0.0
          %373 = vmatprep.subr.mxu0 0.0
          %374 = vmatpush2.msra.mxu0 0.0
          %375 = vmatprep.mubr.f32.mxu0 0.0
          %376 = vmatmul.mubr.f32.gmra.mxu0 %v309
          %v377 = vpop.f32.mrf.mxu0
          %v378 = vadd.f32 %v305, %v377
          %v379 = vpop.f32.mrf.mxu0
          %380 = vdwg.mxu0
          %v381 = vmul.f32 %v378, 0.17677669
          %382 = vst.msk [vmem:[#allocation2] sm:$0xff] %vm307, %v381
          %vm383 = vcmask 7168
          %384 = vst.msk [vmem:[#allocation3] sm:$0xff] %vm383, -inf
          %385 = vst.msk [vmem:[#allocation4] sm:$0xff] %vm383, 0.0
          %386 = vst.msk [vmem:[#allocation5] sm:$0xff] %vm307, 0.0
        $region52: #{tpu_custom_call.1} parent=35 // pred_fallthru
          _
        %v387 = vld [vmem:[%s257] sm:$0xff]
        %s388 = scalar_lea.vmem [#allocation11], 32
        %v389 = vld [vmem:[%s388] sm:$0xff]
        %v390 = vld [vmem:[%s388 + $0x8] sm:$0xff]
        %v391 = vld [vmem:[%s388 + $0x10] sm:$0xff]
        %v392 = vld [vmem:[%s388 + $0x18] sm:$0xff]
        %s393 = scalar_lea.vmem %s3, 1
        %v394 = vld [vmem:[%s393] sm:$0x1]
        %v396 = vlaneseq
        %v397 = vshrl.u32 %v396, 7
        %v398 = vsub.s32 0, %v397
        %v399 = vrot.slane %v394, %v398
        %vm401 = vcmask 261120
        %v403 = vsel %vm401, %v387, 0
        %405 = vmatprep.subr.mxu0 0.0
        %406 = vmatpush1.msra.mxu0 0.0
        %407 = vmatprep.subr.mxu0 0.0
        %408 = vmatpush1.msra.mxu0 0.0
        %409 = vmatprep.subr.mxu0 0.0
        %410 = vmatpush1.msra.mxu0 0.0
        %411 = vmatprep.subr.mxu0 0.0
        %412 = vmatpush1.msra.mxu0 0.0
        %413 = vmatprep.subr.mxu0 0.0
        %414 = vmatpush1.msra.mxu0 0.0
        %415 = vmatprep.subr.mxu0 0.0
        %416 = vmatpush1.msra.mxu0 0.0
        %417 = vmatprep.subr.mxu0 0.0
        %418 = vmatpush1.msra.mxu0 0.0
        %419 = vmatprep.subr.mxu0 0.0
        %420 = vmatpush1.msra.mxu0 0.0
        %421 = vmatprep.subr.mxu0 0.0
        %422 = vmatpush1.msra.mxu0 0.0
        %423 = vmatprep.subr.mxu0 0.0
        %424 = vmatpush1.msra.mxu0 0.0
        %425 = vmatprep.subr.mxu0 0.0
        %426 = vmatpush1.msra.mxu0 0.0
        %427 = vmatprep.subr.mxu0 0.0
        %428 = vmatpush1.msra.mxu0 0.0
        %429 = vmatprep.subr.mxu0 0.0
        %430 = vmatpush1.msra.mxu0 %v392
        %431 = vmatprep.subr.mxu0 0.0
        %432 = vmatpush1.msra.mxu0 %v391
        %433 = vmatprep.subr.mxu0 0.0
        %434 = vmatpush1.msra.mxu0 %v390
        %435 = vmatprep.subr.mxu0 0.0
        %436 = vmatpush1.msra.mxu0 %v389
        %437 = vmatprep.subr.mxu0 0.0
        %438 = vmatpush2.msra.mxu0 0.0
        %439 = vmatprep.subr.mxu0 0.0
        %440 = vmatpush2.msra.mxu0 0.0
        %441 = vmatprep.subr.mxu0 0.0
        %442 = vmatpush2.msra.mxu0 0.0
        %443 = vmatprep.subr.mxu0 0.0
        %444 = vmatpush2.msra.mxu0 0.0
        %445 = vmatprep.subr.mxu0 0.0
        %446 = vmatpush2.msra.mxu0 0.0
        %447 = vmatprep.subr.mxu0 0.0
        %448 = vmatpush2.msra.mxu0 0.0
        %449 = vmatprep.subr.mxu0 0.0
        %450 = vmatpush2.msra.mxu0 0.0
        %451 = vmatprep.subr.mxu0 0.0
        %452 = vmatpush2.msra.mxu0 0.0
        %453 = vmatprep.subr.mxu0 0.0
        %454 = vmatpush2.msra.mxu0 0.0
        %455 = vmatprep.subr.mxu0 0.0
        %456 = vmatpush2.msra.mxu0 0.0
        %457 = vmatprep.subr.mxu0 0.0
        %458 = vmatpush2.msra.mxu0 0.0
        %459 = vmatprep.subr.mxu0 0.0
        %460 = vmatpush2.msra.mxu0 0.0
        %461 = vmatprep.subr.mxu0 0.0
        %462 = vmatpush2.msra.mxu0 0.0
        %463 = vmatprep.subr.mxu0 0.0
        %464 = vmatpush2.msra.mxu0 0.0
        %465 = vmatprep.subr.mxu0 0.0
        %466 = vmatpush2.msra.mxu0 0.0
        %467 = vmatprep.subr.mxu0 0.0
        %468 = vmatpush2.msra.mxu0 0.0
        %469 = vmatprep.mubr.f32.mxu0 0.0
        %470 = vmatmul.mubr.f32.gmra.mxu0 %v403
        %v471 = vpop.f32.mrf.mxu0
        %v472 = vadd.f32 %v399, %v471
        %v473 = vpop.f32.mrf.mxu0
        %474 = vdwg.mxu0
        %s475 = scalar_lea.vmem [#allocation11], 64
        %v476 = vld [vmem:[%s475] sm:$0xff]
        %v477 = vld [vmem:[%s475 + $0x8] sm:$0xff]
        %v478 = vld [vmem:[%s475 + $0x10] sm:$0xff]
        %v479 = vld [vmem:[%s475 + $0x18] sm:$0xff]
        %s480 = scalar_lea.vmem %s3, 2
        %v481 = vld [vmem:[%s480] sm:$0x1]
        %v483 = vlaneseq
        %v484 = vshrl.u32 %v483, 7
        %v485 = vsub.s32 0, %v484
        %v486 = vrot.slane %v481, %v485
        %488 = vmatprep.subr.mxu0 0.0
        %489 = vmatpush1.msra.mxu0 0.0
        %490 = vmatprep.subr.mxu0 0.0
        %491 = vmatpush1.msra.mxu0 0.0
        %492 = vmatprep.subr.mxu0 0.0
        %493 = vmatpush1.msra.mxu0 0.0
        %494 = vmatprep.subr.mxu0 0.0
        %495 = vmatpush1.msra.mxu0 0.0
        %496 = vmatprep.subr.mxu0 0.0
        %497 = vmatpush1.msra.mxu0 0.0
        %498 = vmatprep.subr.mxu0 0.0
        %499 = vmatpush1.msra.mxu0 0.0
        %500 = vmatprep.subr.mxu0 0.0
        %501 = vmatpush1.msra.mxu0 0.0
        %502 = vmatprep.subr.mxu0 0.0
        %503 = vmatpush1.msra.mxu0 0.0
        %504 = vmatprep.subr.mxu0 0.0
        %505 = vmatpush1.msra.mxu0 0.0
        %506 = vmatprep.subr.mxu0 0.0
        %507 = vmatpush1.msra.mxu0 0.0
        %508 = vmatprep.subr.mxu0 0.0
        %509 = vmatpush1.msra.mxu0 0.0
        %510 = vmatprep.subr.mxu0 0.0
        %511 = vmatpush1.msra.mxu0 0.0
        %512 = vmatprep.subr.mxu0 0.0
        %513 = vmatpush1.msra.mxu0 %v479
        %514 = vmatprep.subr.mxu0 0.0
        %515 = vmatpush1.msra.mxu0 %v478
        %516 = vmatprep.subr.mxu0 0.0
        %517 = vmatpush1.msra.mxu0 %v477
        %518 = vmatprep.subr.mxu0 0.0
        %519 = vmatpush1.msra.mxu0 %v476
        %520 = vmatprep.subr.mxu0 0.0
        %521 = vmatpush2.msra.mxu0 0.0
        %522 = vmatprep.subr.mxu0 0.0
        %523 = vmatpush2.msra.mxu0 0.0
        %524 = vmatprep.subr.mxu0 0.0
        %525 = vmatpush2.msra.mxu0 0.0
        %526 = vmatprep.subr.mxu0 0.0
        %527 = vmatpush2.msra.mxu0 0.0
        %528 = vmatprep.subr.mxu0 0.0
        %529 = vmatpush2.msra.mxu0 0.0
        %530 = vmatprep.subr.mxu0 0.0
        %531 = vmatpush2.msra.mxu0 0.0
        %532 = vmatprep.subr.mxu0 0.0
        %533 = vmatpush2.msra.mxu0 0.0
        %534 = vmatprep.subr.mxu0 0.0
        %535 = vmatpush2.msra.mxu0 0.0
        %536 = vmatprep.subr.mxu0 0.0
        %537 = vmatpush2.msra.mxu0 0.0
        %538 = vmatprep.subr.mxu0 0.0
        %539 = vmatpush2.msra.mxu0 0.0
        %540 = vmatprep.subr.mxu0 0.0
        %541 = vmatpush2.msra.mxu0 0.0
        %542 = vmatprep.subr.mxu0 0.0
        %543 = vmatpush2.msra.mxu0 0.0
        %544 = vmatprep.subr.mxu0 0.0
        %545 = vmatpush2.msra.mxu0 0.0
        %546 = vmatprep.subr.mxu0 0.0
        %547 = vmatpush2.msra.mxu0 0.0
        %548 = vmatprep.subr.mxu0 0.0
        %549 = vmatpush2.msra.mxu0 0.0
        %550 = vmatprep.subr.mxu0 0.0
        %551 = vmatpush2.msra.mxu0 0.0
        %552 = vmatprep.mubr.f32.mxu0 0.0
        %553 = vmatmul.mubr.f32.gmra.mxu0 %v403
        %v554 = vpop.f32.mrf.mxu0
        %v555 = vadd.f32 %v486, %v554
        %v556 = vpop.f32.mrf.mxu0
        %557 = vdwg.mxu0
        %v558 = vld [vmem:[#allocation2] sm:$0xff]
        %v560 = vsel %vm401, %v558, 0
        %v563 = vsel %vm401, %v472, 0
        %565 = vmatprep.subr.mxu0 0.0
        %566 = vmatpush1.xpose.msra.mxu0 0.0
        %567 = vmatprep.subr.mxu0 0.0
        %568 = vmatpush1.xpose.msra.mxu0 0.0
        %569 = vmatprep.subr.mxu0 0.0
        %570 = vmatpush1.xpose.msra.mxu0 0.0
        %571 = vmatprep.subr.mxu0 0.0
        %572 = vmatpush1.xpose.msra.mxu0 0.0
        %573 = vmatprep.subr.mxu0 0.0
        %574 = vmatpush1.xpose.msra.mxu0 0.0
        %575 = vmatprep.subr.mxu0 0.0
        %576 = vmatpush1.xpose.msra.mxu0 0.0
        %577 = vmatprep.subr.mxu0 0.0
        %578 = vmatpush1.xpose.msra.mxu0 0.0
        %579 = vmatprep.subr.mxu0 0.0
        %580 = vmatpush1.xpose.msra.mxu0 0.0
        %581 = vmatprep.subr.mxu0 0.0
        %582 = vmatpush1.xpose.msra.mxu0 0.0
        %583 = vmatprep.subr.mxu0 0.0
        %584 = vmatpush1.xpose.msra.mxu0 0.0
        %585 = vmatprep.subr.mxu0 0.0
        %586 = vmatpush1.xpose.msra.mxu0 0.0
        %587 = vmatprep.subr.mxu0 0.0
        %588 = vmatpush1.xpose.msra.mxu0 0.0
        %589 = vmatprep.subr.mxu0 0.0
        %590 = vmatpush1.xpose.msra.mxu0 0.0
        %591 = vmatprep.subr.mxu0 0.0
        %592 = vmatpush1.xpose.msra.mxu0 0.0
        %593 = vmatprep.subr.mxu0 0.0
        %594 = vmatpush1.xpose.msra.mxu0 0.0
        %595 = vmatprep.subr.mxu0 0.0
        %596 = vmatpush1.xpose.msra.mxu0 %v563
        %597 = vmatprep.subr.mxu0 0.0
        %598 = vmatpush2.xpose.msra.mxu0 0.0
        %599 = vmatprep.subr.mxu0 0.0
        %600 = vmatpush2.xpose.msra.mxu0 0.0
        %601 = vmatprep.subr.mxu0 0.0
        %602 = vmatpush2.xpose.msra.mxu0 0.0
        %603 = vmatprep.subr.mxu0 0.0
        %604 = vmatpush2.xpose.msra.mxu0 0.0
        %605 = vmatprep.subr.mxu0 0.0
        %606 = vmatpush2.xpose.msra.mxu0 0.0
        %607 = vmatprep.subr.mxu0 0.0
        %608 = vmatpush2.xpose.msra.mxu0 0.0
        %609 = vmatprep.subr.mxu0 0.0
        %610 = vmatpush2.xpose.msra.mxu0 0.0
        %611 = vmatprep.subr.mxu0 0.0
        %612 = vmatpush2.xpose.msra.mxu0 0.0
        %613 = vmatprep.subr.mxu0 0.0
        %614 = vmatpush2.xpose.msra.mxu0 0.0
        %615 = vmatprep.subr.mxu0 0.0
        %616 = vmatpush2.xpose.msra.mxu0 0.0
        %617 = vmatprep.subr.mxu0 0.0
        %618 = vmatpush2.xpose.msra.mxu0 0.0
        %619 = vmatprep.subr.mxu0 0.0
        %620 = vmatpush2.xpose.msra.mxu0 0.0
        %621 = vmatprep.subr.mxu0 0.0
        %622 = vmatpush2.xpose.msra.mxu0 0.0
        %623 = vmatprep.subr.mxu0 0.0
        %624 = vmatpush2.xpose.msra.mxu0 0.0
        %625 = vmatprep.subr.mxu0 0.0
        %626 = vmatpush2.xpose.msra.mxu0 0.0
        %627 = vmatprep.subr.mxu0 0.0
        %628 = vmatpush2.xpose.msra.mxu0 0.0
        %629 = vmatprep.mubr.f32.mxu0 0.0
        %630 = vmatmul.mubr.f32.gmra.mxu0 %v560
        %v631 = vpop.f32.mrf.mxu0
        %v632 = vadd.f32 0.0, %v631
        %v633 = vpop.f32.mrf.mxu0
        %634 = vdwg.mxu0
        %v635 = vld [vmem:[#allocation3] sm:$0xff]
        %vm636 = vcmask 64512
        %v637 = vsel %vm636, %v632, -inf
        %638 = vmax.xlane.f32.xlu0 %v637
        %v639 = vpop.xlane.xlu0 %638
        %v640 = vmax.f32 %v635, %v639
        %v641 = vsub.f32 %v635, %v640
        %v642 = vmul.f32 %v641, 1.442695
        %v643 = vpow.pop %v642
        %645 = vset.pattern.permute.xlu0 0
        %646 = vperm.xlu0 %645, %v640
        %v647 = vpop.permute.xlu0 %646
        %v649 = vsub.f32 %v632, %v647
        %v650 = vmul.f32 %v649, 1.442695
        %v651 = vpow.pop %v650
        %v652 = vld [vmem:[#allocation4] sm:$0xff]
        %v653 = vmul.f32 %v643, %v652
        %v654 = vsel %vm636, %v651, 0.0
        %655 = vadd.xlane.f32.xlu0 %v654
        %v656 = vpop.xlane.xlu0 %655
        %v657 = vadd.f32 %v653, %v656
        %vm658 = vcmask 7168
        %659 = vst.msk [vmem:[#allocation4] sm:$0xff] %vm658, %v657
        %v660 = vld [vmem:[#allocation5] sm:$0xff]
        %662 = vset.pattern.permute.xlu0 0
        %663 = vperm.xlu0 %662, %v643
        %v664 = vpop.permute.xlu0 %663
        %v666 = vmul.f32 %v664, %v660
        %v668 = vsel %vm636, %v651, 0
        %670 = vmatprep.subr.mxu0 0.0
        %671 = vmatpush1.msra.mxu0 0.0
        %672 = vmatprep.subr.mxu0 0.0
        %673 = vmatpush1.msra.mxu0 0.0
        %674 = vmatprep.subr.mxu0 0.0
        %675 = vmatpush1.msra.mxu0 0.0
        %676 = vmatprep.subr.mxu0 0.0
        %677 = vmatpush1.msra.mxu0 0.0
        %678 = vmatprep.subr.mxu0 0.0
        %679 = vmatpush1.msra.mxu0 0.0
        %680 = vmatprep.subr.mxu0 0.0
        %681 = vmatpush1.msra.mxu0 0.0
        %682 = vmatprep.subr.mxu0 0.0
        %683 = vmatpush1.msra.mxu0 0.0
        %684 = vmatprep.subr.mxu0 0.0
        %685 = vmatpush1.msra.mxu0 0.0
        %686 = vmatprep.subr.mxu0 0.0
        %687 = vmatpush1.msra.mxu0 0.0
        %688 = vmatprep.subr.mxu0 0.0
        %689 = vmatpush1.msra.mxu0 0.0
        %690 = vmatprep.subr.mxu0 0.0
        %691 = vmatpush1.msra.mxu0 0.0
        %692 = vmatprep.subr.mxu0 0.0
        %693 = vmatpush1.msra.mxu0 0.0
        %694 = vmatprep.subr.mxu0 0.0
        %695 = vmatpush1.msra.mxu0 0.0
        %696 = vmatprep.subr.mxu0 0.0
        %697 = vmatpush1.msra.mxu0 0.0
        %698 = vmatprep.subr.mxu0 0.0
        %699 = vmatpush1.msra.mxu0 0.0
        %700 = vmatprep.subr.mxu0 0.0
        %701 = vmatpush1.msra.mxu0 %v555
        %702 = vmatprep.subr.mxu0 0.0
        %703 = vmatpush2.msra.mxu0 0.0
        %704 = vmatprep.subr.mxu0 0.0
        %705 = vmatpush2.msra.mxu0 0.0
        %706 = vmatprep.subr.mxu0 0.0
        %707 = vmatpush2.msra.mxu0 0.0
        %708 = vmatprep.subr.mxu0 0.0
        %709 = vmatpush2.msra.mxu0 0.0
        %710 = vmatprep.subr.mxu0 0.0
        %711 = vmatpush2.msra.mxu0 0.0
        %712 = vmatprep.subr.mxu0 0.0
        %713 = vmatpush2.msra.mxu0 0.0
        %714 = vmatprep.subr.mxu0 0.0
        %715 = vmatpush2.msra.mxu0 0.0
        %716 = vmatprep.subr.mxu0 0.0
        %717 = vmatpush2.msra.mxu0 0.0
        %718 = vmatprep.subr.mxu0 0.0
        %719 = vmatpush2.msra.mxu0 0.0
        %720 = vmatprep.subr.mxu0 0.0
        %721 = vmatpush2.msra.mxu0 0.0
        %722 = vmatprep.subr.mxu0 0.0
        %723 = vmatpush2.msra.mxu0 0.0
        %724 = vmatprep.subr.mxu0 0.0
        %725 = vmatpush2.msra.mxu0 0.0
        %726 = vmatprep.subr.mxu0 0.0
        %727 = vmatpush2.msra.mxu0 0.0
        %728 = vmatprep.subr.mxu0 0.0
        %729 = vmatpush2.msra.mxu0 0.0
        %730 = vmatprep.subr.mxu0 0.0
        %731 = vmatpush2.msra.mxu0 0.0
        %732 = vmatprep.subr.mxu0 0.0
        %733 = vmatpush2.msra.mxu0 0.0
        %734 = vmatprep.mubr.f32.mxu0 0.0
        %735 = vmatmul.mubr.f32.gmra.mxu0 %v668
        %v736 = vpop.f32.mrf.mxu0
        %v737 = vadd.f32 0.0, %v736
        %v738 = vpop.f32.mrf.mxu0
        %739 = vdwg.mxu0
        %v740 = vadd.f32 %v666, %v737
        %741 = vst.msk [vmem:[#allocation5] sm:$0xff] %vm401, %v740
        %742 = vst.msk [vmem:[#allocation3] sm:$0xff] %vm658, %v640
        // Predicated region
        $region53: #{tpu_custom_call.1} parent=35 // pred_check
          %p743 = pneg %p291
        $region54: #{tpu_custom_call.1} parent=35 // pred_check_branch
          %745 = sbr.rel (%p743) target = $region56
        $region55: #{tpu_custom_call.1} parent=35 // pred_region
          %v746 = vld [vmem:[#allocation4] sm:$0xff]
          %v747 = vrcp.pop %v746
          %v748 = vld [vmem:[#allocation5] sm:$0xff]
          %750 = vset.pattern.permute.xlu0 0
          %751 = vperm.xlu0 %750, %v747
          %v752 = vpop.permute.xlu0 %751
          %v754 = vmul.f32 %v748, %v752
          %755 = vst.msk [vmem:[%s290] sm:$0xff] %vm401, %v754
        $region56: #{tpu_custom_call.1} parent=35 // pred_fallthru
          _
        %s756 = sand.u32 %s151, 1
        %s757 = scalar_lea.sflag [#allocation8], %s756
        %s758 = sand.u32 %s151, 1
        %s759 = smul.addr %s758, 8
        %s760 = scalar_lea.vmem [#allocation12], %s759
        // Predicated region
        $region57: #{tpu_custom_call.1} parent=35 // pred_check
          %p761 = pneg %p161
        $region58: #{tpu_custom_call.1} parent=35 // pred_check_branch
          %763 = sbr.rel (%p761) target = $region60
        $region59: #{tpu_custom_call.1} parent=35 // pred_region
          %s765 = ssub.s32 128, 128
          %766 = vsyncadd %s757, %s765
          %s767 = sadd.s32 %s30, %s29
          %s768 = smul.addr %s767, 128
          %s769 = scalar_lea.hbm %s4, %s768
          %s771 = sshll.u32 %s760, 4
          %s772 = int_to_ptr.vmem [resolvable:$true] %s771
          %774 = dma.vmem_to_hbm [thread:$0]  %s772, 128, %s769, %s757
        $region60: #{tpu_custom_call.1} parent=35 // pred_fallthru
          _
      $region36: #{tpu_custom_call.1} parent=5 // pred_fallthru
        _
      %p775 = scmp.le.s32.totalorder 2, %s19
      // Predicated region
      $region61: #{tpu_custom_call.1} parent=5 // pred_check
        %p776 = pneg %p775
      $region62: #{tpu_custom_call.1} parent=5 // pred_check_branch
        %778 = sbr.rel (%p776) target = $region64
      $region63: #{tpu_custom_call.1} parent=5 // pred_region
        %s779 = ssub.s32 %s19, 2
        // Predicated region
        $region65: #{tpu_custom_call.1} parent=63 // pred_check
          %p780 = pneg %p167
        $region66: #{tpu_custom_call.1} parent=63 // pred_check_branch
          %782 = sbr.rel (%p780) target = $region68
        $region67: #{tpu_custom_call.1} parent=63 // pred_region
          %s783 = sand.u32 %s152, 1
          %s784 = scalar_lea.sflag [#allocation8], %s783
          %s785 = sand.u32 %s152, 1
          %s786 = smul.addr %s785, 8
          %s787 = scalar_lea.vmem [#allocation12], %s786
          %788 = dma.done %s784, 128
        $region68: #{tpu_custom_call.1} parent=63 // pred_fallthru
          _
      $region64: #{tpu_custom_call.1} parent=5 // pred_fallthru
        _
    $region6: #{tpu_custom_call.1} parent=1 // loop_footer
      %s23 = sadd.s32 1, %s19
    $region7: #{tpu_custom_call.1} parent=1 // loop_footer_branch
      %18 = sbr.rel target = $region3
    $region8: #{tpu_custom_call.1} parent=1 // loop_exit
      _
    %789 = vsyncpa [#allocation7], 1
    %s790 = scalar_lea.sflag [#allocation7], 1
    %791 = vsyncpa %s790, 1
    %792 = vsyncpa [#allocation10], 1
    %s793 = scalar_lea.sflag [#allocation10], 1
    %794 = vsyncpa %s793, 1
    %795 = vsyncpa [#allocation8], 1
    %s796 = scalar_lea.sflag [#allocation8], 1
    %797 = vsyncpa %s796, 1

</llo_original>
